<compile_context>
chip_gen: v5e
topology: v5e:2x2
jax: 0.10.0
libtpu: 0.0.40
codegen_flags: <defaults>
</compile_context>

<pallas_src>
import jax
import jax.numpy as jnp
from jax.experimental import pallas as pl
from jax.experimental.pallas import tpu as pltpu


def _round_up(x, m):
    return ((x + m - 1) // m) * m


def _sublane_multiple(dtype):
    # minimum sublane tile for packed sub-32-bit dtypes
    return {4: 8, 2: 16, 1: 32}.get(jnp.dtype(dtype).itemsize, 8)


def _chip_defaults():
    """Tile/VMEM budgets and grid-step targets, gated on chip generation.

    v7x-class chips have 64 MiB VMEM per TensorCore (vs 128 MiB on v5e/v6e)
    and 2 TensorCores per chip, so: smaller tiles, smaller scoped-VMEM limit,
    and >=4 grid steps so each core keeps a software pipeline.
    """
    try:
        info = pltpu.get_tpu_info()
        vmem = getattr(info, "vmem_capacity_bytes", None)
        if vmem is not None and vmem <= 80 * 1024 * 1024:
            return dict(tile_bytes=4 << 20, vmem_limit=36 << 20,
                        target_steps=4, min_split_bytes=512 << 10)
    except Exception:
        pass
    # v5e / v6e (single TensorCore, 128 MiB VMEM)
    return dict(tile_bytes=8 << 20, vmem_limit=64 << 20,
                target_steps=2, min_split_bytes=512 << 10)


def _pick_tb(B, row_bytes, mult, tile_bytes, target_steps, min_split_bytes):
    """Largest batch tile under the VMEM budget; split for pipelining only
    when each resulting tile stays reasonably large."""
    b_round = _round_up(B, mult)
    tb_budget = max(mult, (tile_bytes // row_bytes) // mult * mult)
    tb = min(tb_budget, b_round)
    if target_steps > 1:
        tb_split = _round_up(-(-b_round // target_steps), mult)
        if tb_split * row_bytes >= min_split_bytes:
            tb = min(tb, tb_split)
    return tb


def _soft_attention_kernel_masked(reps_ref, w_ref, mask_ref, b_ref, out_ref):
    # reps_ref: (TB, H) native dtype; w_ref: (1, H) f32; mask_ref: (TB, 1) f32;
    # b_ref: (1, 1) f32 in SMEM; out_ref: (TB, H) native dtype.
    reps = reps_ref[...]
    scores = jnp.sum(reps.astype(jnp.float32) * w_ref[...], axis=-1,
                     keepdims=True) + b_ref[0, 0]                  # (TB, 1) f32
    scores = scores * mask_ref[...]
    # Final broadcast-multiply in the native dtype (no second f32 tile copy).
    out_ref[...] = (reps * scores.astype(out_ref.dtype)).astype(out_ref.dtype)


def _soft_attention_kernel_nomask(reps_ref, w_ref, b_ref, out_ref):
    reps = reps_ref[...]
    scores = jnp.sum(reps.astype(jnp.float32) * w_ref[...], axis=-1,
                     keepdims=True) + b_ref[0, 0]                  # (TB, 1) f32
    out_ref[...] = (reps * scores.astype(out_ref.dtype)).astype(out_ref.dtype)


def soft_attention(reps, attn_w, attn_b, mask=None, *, tb=None,
                   tile_bytes=None, vmem_limit_bytes=None):
    """reps: (B, H); attn_w: (1, H) or (H,); attn_b: (1,) or scalar; mask: (B, 1) or None."""
    B, H = reps.shape
    dtype = reps.dtype
    itemsize = jnp.dtype(dtype).itemsize
    mult = _sublane_multiple(dtype)

    defaults = _chip_defaults()
    if tile_bytes is None:
        tile_bytes = defaults["tile_bytes"]
    if vmem_limit_bytes is None:
        vmem_limit_bytes = defaults["vmem_limit"]

    # In-VMEM footprint per row is lane-padded to 128; HBM traffic stays H-wide.
    lane_h = _round_up(max(H, 1), 128)
    row_bytes = lane_h * itemsize
    if tb is None:
        tb = _pick_tb(B, row_bytes, mult, tile_bytes,
                      defaults["target_steps"], defaults["min_split_bytes"])
    grid = (pl.cdiv(B, tb),)   # last block may be partial; Pallas clips writeback

    # Weight / mask stay in f32 (negligible HBM cost, matches f32 reference math);
    # bias is a (1,1) f32 scalar in SMEM.
    w2 = jnp.asarray(attn_w, jnp.float32).reshape(1, H)
    b2 = jnp.asarray(attn_b, jnp.float32).reshape(1, 1)

    if mask is not None:
        mask2 = jnp.asarray(mask, jnp.float32).reshape(B, 1)
        kernel = _soft_attention_kernel_masked
        in_specs = [
            pl.BlockSpec((tb, H), lambda i: (i, 0)),           # reps tile (unpadded)
            pl.BlockSpec((1, H), lambda i: (0, 0)),            # attn weight (resident)
            pl.BlockSpec((tb, 1), lambda i: (i, 0)),           # mask tile
            pl.BlockSpec(memory_space=pltpu.MemorySpace.SMEM), # bias scalar in SMEM
        ]
        args = (reps, w2, mask2, b2)
    else:
        kernel = _soft_attention_kernel_nomask
        in_specs = [
            pl.BlockSpec((tb, H), lambda i: (i, 0)),
            pl.BlockSpec((1, H), lambda i: (0, 0)),
            pl.BlockSpec(memory_space=pltpu.MemorySpace.SMEM),
        ]
        args = (reps, w2, b2)

    return pl.pallas_call(
        kernel,
        out_shape=jax.ShapeDtypeStruct((B, H), dtype),         # true width, no slice after
        grid_spec=pltpu.PrefetchScalarGridSpec(
            num_scalar_prefetch=0,
            grid=grid,
            in_specs=in_specs,
            out_specs=pl.BlockSpec((tb, H), lambda i: (i, 0)),
        ),
        compiler_params=pltpu.CompilerParams(
            dimension_semantics=("parallel",),
            vmem_limit_bytes=vmem_limit_bytes,
        ),
    )(*args)


def soft_attention_ref(reps, attn_w, attn_b, mask=None):
    """Pure-JAX reference mirroring the PyTorch module exactly."""
    w = jnp.asarray(attn_w, jnp.float32).reshape(-1)           # (H,)
    b = jnp.asarray(attn_b, jnp.float32).reshape(())
    scores = reps.astype(jnp.float32) @ w + b                  # (B,)
    scores = scores[:, None]                                   # (B, 1)
    if mask is not None:
        scores = jnp.asarray(mask, jnp.float32).reshape(scores.shape) * scores
    return (reps.astype(jnp.float32) * scores).astype(reps.dtype)


if __name__ == "__main__":
    B, H = 16, 32
    key = jax.random.PRNGKey(0)
    k_reps, k_w, k_b, k_mask = jax.random.split(key, 4)

    # Deterministic "parameters" for nn.Linear(hidden_size, 1):
    #   weight: (1, H), bias: (1,)  (PyTorch-style uniform(-1/sqrt(H), 1/sqrt(H)))
    bound = 1.0 / jnp.sqrt(jnp.float32(H))
    attn_w = jax.random.uniform(k_w, (1, H), jnp.float32, -bound, bound)
    attn_b = jax.random.uniform(k_b, (1,), jnp.float32, -bound, bound)

    reps = jax.random.normal(k_reps, (B, H), jnp.float32)
    mask = (jax.random.uniform(k_mask, (B, 1)) > 0.3).astype(jnp.float32)

    # with mask
    out = jax.block_until_ready(soft_attention(reps, attn_w, attn_b, mask))
    ref = soft_attention_ref(reps, attn_w, attn_b, mask)
    assert out.shape == (B, H)
    assert jnp.allclose(out, ref, atol=1e-5, rtol=1e-5)

    # without mask (separate kernel variant, no ones() DMA)
    out_nm = jax.block_until_ready(soft_attention(reps, attn_w, attn_b, None))
    ref_nm = soft_attention_ref(reps, attn_w, attn_b, None)
    assert jnp.allclose(out_nm, ref_nm, atol=1e-5, rtol=1e-5)

    # ragged B (B % tb != 0, partial tail block), non-128 H, multi-step grid
    B2, H2 = 37, 100
    reps2 = jax.random.normal(jax.random.PRNGKey(1), (B2, H2), jnp.float32)
    w2 = jax.random.uniform(jax.random.PRNGKey(2), (1, H2), jnp.float32, -0.1, 0.1)
    b2 = jnp.float32(0.05).reshape(1)
    mask2 = (jax.random.uniform(jax.random.PRNGKey(3), (B2, 1)) > 0.5).astype(jnp.float32)
    out2 = jax.block_until_ready(soft_attention(reps2, w2, b2, mask2, tb=8))
    ref2 = soft_attention_ref(reps2, w2, b2, mask2)
    assert out2.shape == (B2, H2)
    assert jnp.allclose(out2, ref2, atol=1e-5, rtol=1e-5)

    # same ragged shapes, no mask, auto tile selection
    out3 = jax.block_until_ready(soft_attention(reps2, w2, b2, None))
    ref3 = soft_attention_ref(reps2, w2, b2, None)
    assert jnp.allclose(out3, ref3, atol=1e-5, rtol=1e-5)

    print("KERNEL_OK")
</pallas_src>

<mosaic_0001>
module attributes {stable_mosaic.version = 11 : i64} {
  func.func @_soft_attention_kernel_masked(%arg0: i32, %arg1: memref<16x32xf32, #tpu.memory_space<vmem>>, %arg2: memref<1x32xf32, #tpu.memory_space<vmem>>, %arg3: memref<16x1xf32, #tpu.memory_space<vmem>>, %arg4: memref<1x1xf32, #tpu.memory_space<smem>>, %arg5: memref<16x32xf32, #tpu.memory_space<vmem>>) attributes {dimension_semantics = [#tpu.dimension_semantics<parallel>], iteration_bounds = array<i64: 1>, scalar_prefetch = 0 : i64, scratch_operands = 0 : i64, tpu.core_type = #tpu.core_type<tc>, window_params = [{transform_indices = @transform_0, window_bounds = array<i64: 16, 32>}, {pipeline_mode = #tpu.pipeline_mode<synchronous>, transform_indices = @transform_1, window_bounds = array<i64: 1, 32>}, {transform_indices = @transform_2, window_bounds = array<i64: 16, 1>}, {transform_indices = @transform_3, window_bounds = array<i64: 1, 1>}, {transform_indices = @transform_4, window_bounds = array<i64: 16, 32>}]} {
    %c0 = arith.constant 0 : index
    %c0_0 = arith.constant 0 : index
    %0 = vector.load %arg1[%c0, %c0_0] : memref<16x32xf32, #tpu.memory_space<vmem>>, vector<16x32xf32>
    %c0_1 = arith.constant 0 : index
    %c0_2 = arith.constant 0 : index
    %1 = vector.load %arg2[%c0_1, %c0_2] : memref<1x32xf32, #tpu.memory_space<vmem>>, vector<1x32xf32>
    %2 = vector.broadcast %1 : vector<1x32xf32> to vector<16x32xf32>
    %3 = arith.mulf %0, %2 : vector<16x32xf32>
    %cst = arith.constant dense<0.000000e+00> : vector<16xf32>
    %4 = vector.multi_reduction <add>, %3, %cst [1] : vector<16x32xf32> to vector<16xf32>
    %5 = vector.shape_cast %4 : vector<16xf32> to vector<16x1xf32>
    %c0_3 = arith.constant 0 : index
    %c0_4 = arith.constant 0 : index
    %6 = memref.load %arg4[%c0_3, %c0_4] : memref<1x1xf32, #tpu.memory_space<smem>>
    %7 = vector.broadcast %6 : f32 to vector<16x1xf32>
    %8 = arith.addf %5, %7 : vector<16x1xf32>
    %c0_5 = arith.constant 0 : index
    %c0_6 = arith.constant 0 : index
    %9 = vector.load %arg3[%c0_5, %c0_6] : memref<16x1xf32, #tpu.memory_space<vmem>>, vector<16x1xf32>
    %10 = arith.mulf %8, %9 : vector<16x1xf32>
    %11 = vector.broadcast %10 : vector<16x1xf32> to vector<16x32xf32>
    %12 = arith.mulf %0, %11 : vector<16x32xf32>
    %c0_7 = arith.constant 0 : index
    %c0_8 = arith.constant 0 : index
    %13 = vector.load %arg5[%c0_7, %c0_8] : memref<16x32xf32, #tpu.memory_space<vmem>>, vector<16x32xf32>
    tpu.vector_store %arg5[%c0_7, %c0_8], %12 {strides = array<i32>} : memref<16x32xf32, #tpu.memory_space<vmem>>, vector<16x32xf32>,
    return
  }
  func.func @transform_0(%arg0: i32) -> (i32, i32) {
    %c0_i32 = arith.constant 0 : i32
    %c0_i32_0 = arith.constant 0 : i32
    return %arg0, %c0_i32 : i32, i32
  }
  func.func @transform_1(%arg0: i32) -> (i32, i32) {
    %c0_i32 = arith.constant 0 : i32
    %c0_i32_0 = arith.constant 0 : i32
    %c0_i32_1 = arith.constant 0 : i32
    return %c0_i32, %c0_i32_0 : i32, i32
  }
  func.func @transform_2(%arg0: i32) -> (i32, i32) {
    %c0_i32 = arith.constant 0 : i32
    %c0_i32_0 = arith.constant 0 : i32
    return %arg0, %c0_i32 : i32, i32
  }
  func.func @transform_3(%arg0: i32) -> (i32, i32) {
    %c0_i32 = arith.constant 0 : i32
    %c0_i32_0 = arith.constant 0 : i32
    %c0_i32_1 = arith.constant 0 : i32
    return %c0_i32, %c0_i32_0 : i32, i32
  }
  func.func @transform_4(%arg0: i32) -> (i32, i32) {
    %c0_i32 = arith.constant 0 : i32
    %c0_i32_0 = arith.constant 0 : i32
    return %arg0, %c0_i32 : i32, i32
  }
}

</mosaic_0001>

<llo_original>
// kernel: tpu_custom_call.1
$region0: #{tpu_custom_call.1}
  #allocation0 [shape = 'u32[]', space=smem, size = 0x4, offset = 0x4, fixed_abs, tag = 'smem constant byte address 0x4 - core index']
  #allocation1 [shape = 'u32[72,128]{1,0:T(1,128)}', space=vmem, size = 0x9000, scoped, tag = 'internal scratch']
  #allocation2 [shape = 'f32[1,1]{1,0:T(1,128)S(6)}', space=smem, size = 0x200, scoped, tag = 'scoped memory for tpu_custom_call.1']
  %s0 = inlined_call_operand.vmem [shape: f32[16,32], index: 0, kind: input, shape index: {}]
  %s1 = inlined_call_operand.vmem [shape: f32[1,32], index: 1, kind: input, shape index: {}]
  %s2 = inlined_call_operand.vmem [shape: f32[16,1], index: 2, kind: input, shape index: {}]
  %s3 = inlined_call_operand.<no memory space> [shape: f32[1,1], index: 3, kind: input, shape index: {}]
  %s4 = inlined_call_operand.hbm [shape: f32[16,32], index: 4, kind: output, shape index: {}]
  %s5 = sld [smem:[#allocation0]]
  $region26: #{tpu_custom_call.1} parent=0
    _
  %s7 = ssub.s32 1, %s5
  %s8 = scalar_select 0, %s7, %s5
  %9 = sst [smem:[#allocation2]] %s3
  $region1: #{tpu_custom_call.1} parent=0
    #allocation3 [shape = 'u8[8192]{0}', space=vmem, size = 0x2000, scoped, tag = 'output window, operand 0, single buffered']
    #allocation4 [shape = 's32[1]{0}', space=sflag, size = 0x4, scoped, tag = 'scoped memory for tpu_custom_call.1']
    %10 = vsyncpa [#allocation4], 0
    // Predicated region
    $region2: #{tpu_custom_call.1} parent=1 // pred_check
      _
    $region3: #{tpu_custom_call.1} parent=1 // pred_check_branch
      %12 = sbr.rel (0) target = $region5
    $region4: #{tpu_custom_call.1} parent=1 // pred_region
      _
    $region5: #{tpu_custom_call.1} parent=1 // pred_fallthru
      _
    // Predicated region
    $region6: #{tpu_custom_call.1} parent=1 // pred_check
      _
    $region7: #{tpu_custom_call.1} parent=1 // pred_check_branch
      %14 = sbr.rel (0) target = $region9
    $region8: #{tpu_custom_call.1} parent=1 // pred_region
      _
    $region9: #{tpu_custom_call.1} parent=1 // pred_fallthru
      _
    // Predicated region
    $region10: #{tpu_custom_call.1} parent=1 // pred_check
      _
    $region11: #{tpu_custom_call.1} parent=1 // pred_check_branch
      %16 = sbr.rel (0) target = $region13
    $region12: #{tpu_custom_call.1} parent=1 // pred_region
      _
    $region13: #{tpu_custom_call.1} parent=1 // pred_fallthru
      _
    // Predicated region
    $region14: #{tpu_custom_call.1} parent=1 // pred_check
      _
    $region15: #{tpu_custom_call.1} parent=1 // pred_check_branch
      %18 = sbr.rel (0) target = $region17
    $region16: #{tpu_custom_call.1} parent=1 // pred_region
      _
    $region17: #{tpu_custom_call.1} parent=1 // pred_fallthru
      _
    %v19 = vld [vmem:[%s0] sm:$0xff]
    %v20 = vld [vmem:[%s0 + $0x8] sm:$0xff]
    %v21 = vld [vmem:[%s1] sm:$0x1]
    %v23 = vperm.slane %v21, 0
    %v25 = vmul.f32 %v19, %v23
    %v26 = vmul.f32 %v20, %v23
    %vm27 = vcmask 261120
    %v28 = vsel %vm27, %v25, 0.0
    %29 = vadd.xlane.f32.xlu0 %v28
    %v30 = vpop.xlane.xlu0 %29
    %v31 = vsel %vm27, %v26, 0.0
    %32 = vadd.xlane.f32.xlu0 %v31
    %v33 = vpop.xlane.xlu0 %32
    %s34 = sld [smem:[#allocation2]]
    %v35 = vstv %s34
    %v36 = vadd.f32 %v30, %v35
    %v37 = vadd.f32 %v33, %v35
    %v38 = vld [vmem:[%s2] sm:$0xff]
    %v39 = vld [vmem:[%s2 + $0x8] sm:$0xff]
    %v40 = vmul.f32 %v36, %v38
    %v41 = vmul.f32 %v37, %v39
    %43 = vset.pattern.permute.xlu0 0
    %44 = vperm.xlu0 %43, %v40
    %v45 = vpop.permute.xlu0 %44
    %48 = vset.pattern.permute.xlu0 0
    %49 = vperm.xlu0 %48, %v41
    %v50 = vpop.permute.xlu0 %49
    %v52 = vmul.f32 %v19, %v45
    %v53 = vmul.f32 %v20, %v50
    %54 = vst.msk [vmem:[#allocation3] sm:$0xff] %vm27, %v52
    %55 = vst.msk [vmem:[#allocation3 + $0x8] sm:$0xff] %vm27, %v53
    // Predicated region
    $region18: #{tpu_custom_call.1} parent=1 // pred_check
      _
    $region19: #{tpu_custom_call.1} parent=1 // pred_check_branch
      %57 = sbr.rel (0) target = $region21
    $region20: #{tpu_custom_call.1} parent=1 // pred_region
      %59 = vsyncadd [#allocation4], 0
      %s60 = sshll.u32 [#allocation3], 4
      %s61 = int_to_ptr.vmem [resolvable:$true] %s60
      %s62 = sshll.u32 %s4, 4
      %s63 = int_to_ptr.hbm [resolvable:$true] %s62
      %68 = dma.vmem_to_hbm [thread:$0]  %s61, 256, %s63, [#allocation4], 128, 128, 8
    $region21: #{tpu_custom_call.1} parent=1 // pred_fallthru
      _
    // Predicated region
    $region22: #{tpu_custom_call.1} parent=1 // pred_check
      _
    $region23: #{tpu_custom_call.1} parent=1 // pred_check_branch
      %70 = sbr.rel (0) target = $region25
    $region24: #{tpu_custom_call.1} parent=1 // pred_region
      %72 = dma.done [#allocation4], 256
    $region25: #{tpu_custom_call.1} parent=1 // pred_fallthru
      _
    %73 = vsyncpa [#allocation4], 1

</llo_original>
